<compile_context>
chip_gen: v7x
topology: tpu7x:2x2x1
jax: 0.10.0
libtpu: 0.0.40
codegen_flags: <defaults>
</compile_context>

<pallas_src>
import jax
import jax.numpy as jnp
from jax.experimental import pallas as pl
from jax.experimental.pallas import tpu as pltpu


def _round_up(n, m):
    return (n + m - 1) // m * m


def reverse_cls_kernel(x_ref, w_ref, b_ref, *out_refs):
    """Fused Linear + Softmax on one (tb, in_p) x-tile.

    out_refs is (lin_ref, soft_ref) or (soft_ref,) depending on whether the
    intermediate linear output is requested.
    """
    x = x_ref[...]                       # (tb, in_p)
    w = w_ref[...]                       # (in_p, out_p)  resident in VMEM
    b = b_ref[...]                       # (1, out_p)     pad cols = -1e30

    # Linear: y = x @ W + b  (MXU, f32 accumulate)
    lin = jnp.dot(x, w, preferred_element_type=jnp.float32) + b

    if len(out_refs) == 2:
        lin_ref, soft_ref = out_refs
        lin_ref[...] = lin.astype(lin_ref.dtype)
    else:
        (soft_ref,) = out_refs

    # Numerically stable softmax over the last dim. Padded columns carry a
    # huge negative bias, so exp() maps them to 0 and they don't pollute sums.
    m = jnp.max(lin, axis=-1, keepdims=True)
    e = jnp.exp(lin - m)
    denom = jnp.sum(e, axis=-1, keepdims=True)
    inv = pl.reciprocal(denom, approx=True)      # EUP vrcp (separate slot, ~free)
    inv = inv * (2.0 - denom * inv)              # 1 Newton step -> full f32 precision
    soft_ref[...] = (e * inv).astype(soft_ref.dtype)


def reverse_cls_forward(x, weight, bias, *, tb=512, return_linear=True,
                        vmem_budget_bytes=40 * 1024 * 1024):
    """ReverseCLS forward: Linear + Softmax in one Pallas kernel.

    x:      (B, in_dim)       f32
    weight: (out_dim, in_dim) f32  (PyTorch nn.Linear layout)
    bias:   (out_dim,)        f32
    Returns [x, linear_out, softmax_out] (or [x, softmax_out] when
    return_linear=False), matching ReverseCLS.forward.

    vmem_budget_bytes defaults to 40 MiB, which is safe on v7x (64 MiB
    physical VMEM per TC). On v5e/v6e (128 MiB) it may be raised toward
    ~100 MiB for larger tiles.
    """
    B, in_dim = x.shape
    out_dim = weight.shape[0]
    n_out = 2 if return_linear else 1

    # Lane-dense / sublane-aligned padded sizes.
    in_p = _round_up(in_dim, 128)
    out_p = _round_up(out_dim, 128)
    b_rows = _round_up(B, 8)            # minimal batch padding (sublane multiple)

    pad_cols_in = in_p != in_dim
    pad_cols_out = out_p != out_dim
    pad_rows = b_rows != B

    # ---- batch tile selection --------------------------------------------
    def footprint(t):
        # Pipelined VMEM bytes for one grid step (f32):
        #   x tile double-buffered, W + bias single-buffered, outputs
        #   double-buffered, plus ~2 (t, out_p) f32 in-kernel temporaries.
        return 4 * (2 * t * in_p
                    + in_p * out_p + out_p
                    + 2 * n_out * t * out_p
                    + 2 * t * out_p)

    tb = min(_round_up(tb, 8), b_rows)
    # Keep the grid >= 2 when possible so ("parallel",) can use both v7x TCs.
    tb = min(tb, max(8, _round_up(pl.cdiv(B, 2), 8)))
    while tb > 8 and footprint(tb) > vmem_budget_bytes:
        tb -= 8

    grid = (pl.cdiv(b_rows, tb),)

    # VMEM limit: footprint + headroom, capped near the budget so we never
    # request v7x's entire physical VMEM.
    vmem_limit = int(min(vmem_budget_bytes + 8 * 1024 * 1024,
                         max(32 * 1024 * 1024, 2 * footprint(tb))))

    # ---- operand preparation (zero-copy when already aligned) -------------
    if pad_cols_in or pad_rows:
        x_p = jnp.zeros((b_rows, in_p), x.dtype).at[:B, :in_dim].set(x)
    else:
        x_p = x

    if pad_cols_in or pad_cols_out:
        w_p = (jnp.zeros((in_p, out_p), weight.dtype)
               .at[:in_dim, :out_dim].set(weight.T))
        # Padded bias columns get a large negative so softmax weights them 0.
        b_p = (jnp.full((1, out_p), -1e30, dtype=jnp.float32)
               .at[0, :out_dim].set(bias.astype(jnp.float32)))
    else:
        w_p = weight.T
        b_p = bias.astype(jnp.float32).reshape(1, out_p)

    cost = pl.CostEstimate(
        flops=2 * b_rows * in_p * out_p,
        transcendentals=b_rows * out_p,
        bytes_accessed=4 * (b_rows * in_p + in_p * out_p + out_p
                            + n_out * b_rows * out_p),
    )

    def _call(single_buffer_w):
        # W / bias have a constant index_map -> no benefit from double
        # buffering; Buffered(1) halves their VMEM footprint.
        const_kw = {"pipeline_mode": pl.Buffered(1)} if single_buffer_w else {}
        in_specs = [
            pl.BlockSpec((tb, in_p), lambda i: (i, 0)),             # x tile
            pl.BlockSpec((in_p, out_p), lambda i: (0, 0), **const_kw),  # W resident
            pl.BlockSpec((1, out_p), lambda i: (0, 0), **const_kw),     # bias resident
        ]
        out_specs = tuple(pl.BlockSpec((tb, out_p), lambda i: (i, 0))
                          for _ in range(n_out))
        out_shape = tuple(jax.ShapeDtypeStruct((b_rows, out_p), jnp.float32)
                          for _ in range(n_out))
        return pl.pallas_call(
            reverse_cls_kernel,
            out_shape=out_shape,
            grid=grid,
            in_specs=in_specs,
            out_specs=out_specs,
            compiler_params=pltpu.CompilerParams(
                dimension_semantics=("parallel",),
                vmem_limit_bytes=vmem_limit,
            ),
            cost_estimate=cost,
        )(x_p, w_p, b_p)

    try:
        outs = _call(single_buffer_w=True)
    except Exception:
        # Fallback for jax versions where pipeline_mode=pl.Buffered(1) is
        # not accepted on constant-index inputs.
        outs = _call(single_buffer_w=False)

    # Strip batch / lane padding only when padding was actually applied.
    if pad_rows or pad_cols_out:
        outs = tuple(o[:B, :out_dim] for o in outs)

    if return_linear:
        lin, soft = outs
        return [x, lin, soft]
    (soft,) = outs
    return [x, soft]


def _reference(x, weight, bias):
    lin = x @ weight.T + bias
    soft = jax.nn.softmax(lin, axis=-1)
    return [x, lin, soft]


def _check(out, ref):
    assert out[0].shape == ref[0].shape
    assert jnp.allclose(out[0], ref[0]), "x passthrough mismatch"
    assert out[1].shape == ref[1].shape
    assert jnp.allclose(out[1], ref[1], atol=1e-5, rtol=1e-5), "linear mismatch"
    assert out[2].shape == ref[2].shape
    assert jnp.allclose(out[2], ref[2], atol=1e-4, rtol=1e-4), "softmax mismatch"


if __name__ == "__main__":
    key = jax.random.PRNGKey(0)

    # Case 1: unaligned shapes (exercises pad/trim path).
    kx, kw, kb, key = jax.random.split(key, 4)
    B, in_dim, out_dim = 8, 32, 16
    x = jax.random.normal(kx, (B, in_dim), dtype=jnp.float32)
    bound = 1.0 / (in_dim ** 0.5)
    weight = jax.random.uniform(kw, (out_dim, in_dim), minval=-bound,
                                maxval=bound, dtype=jnp.float32)
    bias = jax.random.uniform(kb, (out_dim,), minval=-bound, maxval=bound,
                              dtype=jnp.float32)
    out = reverse_cls_forward(x, weight, bias)
    out = [jax.block_until_ready(o) for o in out]
    _check(out, _reference(x, weight, bias))

    # Case 2: aligned shapes (exercises the zero-copy fast path + grid > 1).
    kx, kw, kb, key = jax.random.split(key, 4)
    B2, in2, out2 = 16, 128, 128
    x2 = jax.random.normal(kx, (B2, in2), dtype=jnp.float32)
    bound2 = 1.0 / (in2 ** 0.5)
    w2 = jax.random.uniform(kw, (out2, in2), minval=-bound2, maxval=bound2,
                            dtype=jnp.float32)
    b2 = jax.random.uniform(kb, (out2,), minval=-bound2, maxval=bound2,
                            dtype=jnp.float32)
    out2_ = reverse_cls_forward(x2, w2, b2)
    out2_ = [jax.block_until_ready(o) for o in out2_]
    _check(out2_, _reference(x2, w2, b2))

    print("KERNEL_OK")
</pallas_src>

<mosaic_0001>
module attributes {stable_mosaic.version = 11 : i64} {
  func.func @reverse_cls_kernel(%arg0: i32, %arg1: memref<8x128xf32, #tpu.memory_space<vmem>>, %arg2: memref<128x128xf32, #tpu.memory_space<vmem>>, %arg3: memref<1x128xf32, #tpu.memory_space<vmem>>, %arg4: memref<8x128xf32, #tpu.memory_space<vmem>>, %arg5: memref<8x128xf32, #tpu.memory_space<vmem>>) attributes {dimension_semantics = [#tpu.dimension_semantics<parallel>], iteration_bounds = array<i64: 1>, scalar_prefetch = 0 : i64, scratch_operands = 0 : i64, tpu.core_type = #tpu.core_type<tc>, window_params = [{transform_indices = @transform_0, window_bounds = array<i64: 8, 128>}, {pipeline_mode = #tpu.pipeline_mode<synchronous>, transform_indices = @transform_1, window_bounds = array<i64: 128, 128>}, {pipeline_mode = #tpu.pipeline_mode<synchronous>, transform_indices = @transform_2, window_bounds = array<i64: 1, 128>}, {transform_indices = @transform_3, window_bounds = array<i64: 8, 128>}, {transform_indices = @transform_4, window_bounds = array<i64: 8, 128>}]} {
    %c0 = arith.constant 0 : index
    %c0_0 = arith.constant 0 : index
    %0 = vector.load %arg1[%c0, %c0_0] : memref<8x128xf32, #tpu.memory_space<vmem>>, vector<8x128xf32>
    %c0_1 = arith.constant 0 : index
    %c0_2 = arith.constant 0 : index
    %1 = vector.load %arg2[%c0_1, %c0_2] : memref<128x128xf32, #tpu.memory_space<vmem>>, vector<128x128xf32>
    %c0_3 = arith.constant 0 : index
    %c0_4 = arith.constant 0 : index
    %2 = vector.load %arg3[%c0_3, %c0_4] : memref<1x128xf32, #tpu.memory_space<vmem>>, vector<1x128xf32>
    %cst = arith.constant dense<0.000000e+00> : vector<8x128xf32>
    %3 = tpu.matmul %0, %1, %cst {dimension_numbers = #tpu.dot_dimension_numbers<[1], [0], [0], [1], [0, 0, 1, 1], [], []>} : vector<8x128xf32>, vector<128x128xf32>, vector<8x128xf32> -> vector<8x128xf32>
    %4 = vector.broadcast %2 : vector<1x128xf32> to vector<8x128xf32>
    %5 = arith.addf %3, %4 : vector<8x128xf32>
    %c0_5 = arith.constant 0 : index
    %c0_6 = arith.constant 0 : index
    %6 = vector.load %arg4[%c0_5, %c0_6] : memref<8x128xf32, #tpu.memory_space<vmem>>, vector<8x128xf32>
    tpu.vector_store %arg4[%c0_5, %c0_6], %5 {strides = array<i32>} : memref<8x128xf32, #tpu.memory_space<vmem>>, vector<8x128xf32>,
    %cst_7 = arith.constant dense<0xFF800000> : vector<8xf32>
    %7 = vector.multi_reduction <maximumf>, %5, %cst_7 [1] : vector<8x128xf32> to vector<8xf32>
    %8 = vector.shape_cast %7 : vector<8xf32> to vector<8x1xf32>
    %9 = vector.broadcast %8 : vector<8x1xf32> to vector<8x128xf32>
    %10 = arith.subf %5, %9 : vector<8x128xf32>
    %11 = math.exp %10 : vector<8x128xf32>
    %cst_8 = arith.constant dense<0.000000e+00> : vector<8xf32>
    %12 = vector.multi_reduction <add>, %11, %cst_8 [1] : vector<8x128xf32> to vector<8xf32>
    %13 = vector.shape_cast %12 : vector<8xf32> to vector<8x1xf32>
    %14 = tpu.reciprocal %13 {approx = true} : vector<8x1xf32> -> vector<8x1xf32>
    %15 = arith.mulf %13, %14 : vector<8x1xf32>
    %cst_9 = arith.constant 2.000000e+00 : f32
    %16 = vector.broadcast %cst_9 : f32 to vector<8x1xf32>
    %17 = arith.subf %16, %15 : vector<8x1xf32>
    %18 = arith.mulf %14, %17 : vector<8x1xf32>
    %19 = vector.broadcast %18 : vector<8x1xf32> to vector<8x128xf32>
    %20 = arith.mulf %11, %19 : vector<8x128xf32>
    %c0_10 = arith.constant 0 : index
    %c0_11 = arith.constant 0 : index
    %21 = vector.load %arg5[%c0_10, %c0_11] : memref<8x128xf32, #tpu.memory_space<vmem>>, vector<8x128xf32>
    tpu.vector_store %arg5[%c0_10, %c0_11], %20 {strides = array<i32>} : memref<8x128xf32, #tpu.memory_space<vmem>>, vector<8x128xf32>,
    return
  }
  func.func @transform_0(%arg0: i32) -> (i32, i32) {
    %c0_i32 = arith.constant 0 : i32
    %c0_i32_0 = arith.constant 0 : i32
    return %arg0, %c0_i32 : i32, i32
  }
  func.func @transform_1(%arg0: i32) -> (i32, i32) {
    %c0_i32 = arith.constant 0 : i32
    %c0_i32_0 = arith.constant 0 : i32
    %c0_i32_1 = arith.constant 0 : i32
    return %c0_i32, %c0_i32_0 : i32, i32
  }
  func.func @transform_2(%arg0: i32) -> (i32, i32) {
    %c0_i32 = arith.constant 0 : i32
    %c0_i32_0 = arith.constant 0 : i32
    %c0_i32_1 = arith.constant 0 : i32
    return %c0_i32, %c0_i32_0 : i32, i32
  }
  func.func @transform_3(%arg0: i32) -> (i32, i32) {
    %c0_i32 = arith.constant 0 : i32
    %c0_i32_0 = arith.constant 0 : i32
    return %arg0, %c0_i32 : i32, i32
  }
  func.func @transform_4(%arg0: i32) -> (i32, i32) {
    %c0_i32 = arith.constant 0 : i32
    %c0_i32_0 = arith.constant 0 : i32
    return %arg0, %c0_i32 : i32, i32
  }
}

module attributes {stable_mosaic.version = 11 : i64} {
  func.func @reverse_cls_kernel(%arg0: i32, %arg1: memref<8x128xf32, #tpu.memory_space<vmem>>, %arg2: memref<128x128xf32, #tpu.memory_space<vmem>>, %arg3: memref<1x128xf32, #tpu.memory_space<vmem>>, %arg4: memref<8x128xf32, #tpu.memory_space<vmem>>, %arg5: memref<8x128xf32, #tpu.memory_space<vmem>>) attributes {dimension_semantics = [#tpu.dimension_semantics<parallel>], iteration_bounds = array<i64: 1>, scalar_prefetch = 0 : i64, scratch_operands = 0 : i64, tpu.core_type = #tpu.core_type<tc>, window_params = [{transform_indices = @transform_0, window_bounds = array<i64: 8, 128>}, {pipeline_mode = #tpu.pipeline_mode<synchronous>, transform_indices = @transform_1, window_bounds = array<i64: 128, 128>}, {pipeline_mode = #tpu.pipeline_mode<synchronous>, transform_indices = @transform_2, window_bounds = array<i64: 1, 128>}, {transform_indices = @transform_3, window_bounds = array<i64: 8, 128>}, {transform_indices = @transform_4, window_bounds = array<i64: 8, 128>}]} {
    %c0 = arith.constant 0 : index
    %c0_0 = arith.constant 0 : index
    %0 = vector.load %arg1[%c0, %c0_0] : memref<8x128xf32, #tpu.memory_space<vmem>>, vector<8x128xf32>
    %c0_1 = arith.constant 0 : index
    %c0_2 = arith.constant 0 : index
    %1 = vector.load %arg2[%c0_1, %c0_2] : memref<128x128xf32, #tpu.memory_space<vmem>>, vector<128x128xf32>
    %c0_3 = arith.constant 0 : index
    %c0_4 = arith.constant 0 : index
    %2 = vector.load %arg3[%c0_3, %c0_4] : memref<1x128xf32, #tpu.memory_space<vmem>>, vector<1x128xf32>
    %cst = arith.constant dense<0.000000e+00> : vector<8x128xf32>
    %3 = tpu.matmul %0, %1, %cst {dimension_numbers = #tpu.dot_dimension_numbers<[1], [0], [0], [1], [0, 0, 1, 1], [], []>} : vector<8x128xf32>, vector<128x128xf32>, vector<8x128xf32> -> vector<8x128xf32>
    %4 = vector.broadcast %2 : vector<1x128xf32> to vector<8x128xf32>
    %5 = arith.addf %3, %4 : vector<8x128xf32>
    %c0_5 = arith.constant 0 : index
    %c0_6 = arith.constant 0 : index
    %6 = vector.load %arg4[%c0_5, %c0_6] : memref<8x128xf32, #tpu.memory_space<vmem>>, vector<8x128xf32>
    tpu.vector_store %arg4[%c0_5, %c0_6], %5 {strides = array<i32>} : memref<8x128xf32, #tpu.memory_space<vmem>>, vector<8x128xf32>,
    %cst_7 = arith.constant dense<0xFF800000> : vector<8xf32>
    %7 = vector.multi_reduction <maximumf>, %5, %cst_7 [1] : vector<8x128xf32> to vector<8xf32>
    %8 = vector.shape_cast %7 : vector<8xf32> to vector<8x1xf32>
    %9 = vector.broadcast %8 : vector<8x1xf32> to vector<8x128xf32>
    %10 = arith.subf %5, %9 : vector<8x128xf32>
    %11 = math.exp %10 : vector<8x128xf32>
    %cst_8 = arith.constant dense<0.000000e+00> : vector<8xf32>
    %12 = vector.multi_reduction <add>, %11, %cst_8 [1] : vector<8x128xf32> to vector<8xf32>
    %13 = vector.shape_cast %12 : vector<8xf32> to vector<8x1xf32>
    %14 = tpu.reciprocal %13 {approx = true} : vector<8x1xf32> -> vector<8x1xf32>
    %15 = arith.mulf %13, %14 : vector<8x1xf32>
    %cst_9 = arith.constant 2.000000e+00 : f32
    %16 = vector.broadcast %cst_9 : f32 to vector<8x1xf32>
    %17 = arith.subf %16, %15 : vector<8x1xf32>
    %18 = arith.mulf %14, %17 : vector<8x1xf32>
    %19 = vector.broadcast %18 : vector<8x1xf32> to vector<8x128xf32>
    %20 = arith.mulf %11, %19 : vector<8x128xf32>
    %c0_10 = arith.constant 0 : index
    %c0_11 = arith.constant 0 : index
    %21 = vector.load %arg5[%c0_10, %c0_11] : memref<8x128xf32, #tpu.memory_space<vmem>>, vector<8x128xf32>
    tpu.vector_store %arg5[%c0_10, %c0_11], %20 {strides = array<i32>} : memref<8x128xf32, #tpu.memory_space<vmem>>, vector<8x128xf32>,
    return
  }
  func.func @transform_0(%arg0: i32) -> (i32, i32) {
    %c0_i32 = arith.constant 0 : i32
    %c0_i32_0 = arith.constant 0 : i32
    return %arg0, %c0_i32 : i32, i32
  }
  func.func @transform_1(%arg0: i32) -> (i32, i32) {
    %c0_i32 = arith.constant 0 : i32
    %c0_i32_0 = arith.constant 0 : i32
    %c0_i32_1 = arith.constant 0 : i32
    return %c0_i32, %c0_i32_0 : i32, i32
  }
  func.func @transform_2(%arg0: i32) -> (i32, i32) {
    %c0_i32 = arith.constant 0 : i32
    %c0_i32_0 = arith.constant 0 : i32
    %c0_i32_1 = arith.constant 0 : i32
    return %c0_i32, %c0_i32_0 : i32, i32
  }
  func.func @transform_3(%arg0: i32) -> (i32, i32) {
    %c0_i32 = arith.constant 0 : i32
    %c0_i32_0 = arith.constant 0 : i32
    return %arg0, %c0_i32 : i32, i32
  }
  func.func @transform_4(%arg0: i32) -> (i32, i32) {
    %c0_i32 = arith.constant 0 : i32
    %c0_i32_0 = arith.constant 0 : i32
    return %arg0, %c0_i32 : i32, i32
  }
}

</mosaic_0001>

<llo_original>
// kernel: tpu_custom_call.1
$region0: #{tpu_custom_call.1}
  #allocation0 [shape = 'u32[]', space=smem, size = 0x4, offset = 0x4, fixed_abs, tag = 'smem constant byte address 0x4 - core index']
  #allocation1 [shape = 'u32[144,128]{1,0:T(1,128)}', space=vmem, size = 0x12000, scoped, tag = 'internal scratch']
  %s0 = inlined_call_operand.hbm [shape: f32[8,128], index: 0, kind: input, shape index: {}]
  %s1 = inlined_call_operand.hbm [shape: f32[128,128], index: 1, kind: input, shape index: {}]
  %s2 = inlined_call_operand.vmem [shape: f32[1,128], index: 2, kind: input, shape index: {}]
  %s3 = inlined_call_operand.hbm [shape: f32[8,128], index: 3, kind: output, shape index: {0}]
  %s4 = inlined_call_operand.hbm [shape: f32[8,128], index: 4, kind: output, shape index: {1}]
  %5 = xla_tuple %s3, %s4
  %s6 = sld [smem:[#allocation0]]
  $region38: #{tpu_custom_call.1} parent=0
    _
  %s8 = ssub.s32 1, %s6
  %s9 = scalar_select 0, %s8, %s6
  $region1: #{tpu_custom_call.1} parent=0
    #allocation2 [shape = 'u8[4096]{0}', space=vmem, size = 0x1000, scoped, tag = 'input window, operand 0, single buffered']
    #allocation3 [shape = 's32[1]{0}', space=sflag, size = 0x4, scoped, tag = 'scoped memory for tpu_custom_call.1']
    #allocation4 [shape = 's32[1]{0}', space=sflag, size = 0x4, scoped, tag = 'scoped memory for tpu_custom_call.1']
    #allocation5 [shape = 'u8[65536]{0}', space=vmem, size = 0x10000, scoped, tag = 'input window, operand 1, single buffered']
    #allocation6 [shape = 's32[1]{0}', space=sflag, size = 0x4, scoped, tag = 'scoped memory for tpu_custom_call.1']
    #allocation7 [shape = 'u8[4096]{0}', space=vmem, size = 0x1000, scoped, tag = 'output window, operand 0, single buffered']
    #allocation8 [shape = 'u8[4096]{0}', space=vmem, size = 0x1000, scoped, tag = 'output window, operand 1, single buffered']
    #allocation9 [shape = 's32[1]{0}', space=sflag, size = 0x4, scoped, tag = 'scoped memory for tpu_custom_call.1']
    %10 = vsyncpa [#allocation3], 0
    %11 = vsyncpa [#allocation6], 0
    %12 = vsyncpa [#allocation4], 0
    %13 = vsyncpa [#allocation9], 0
    // Predicated region
    $region2: #{tpu_custom_call.1} parent=1 // pred_check
      _
    $region3: #{tpu_custom_call.1} parent=1 // pred_check_branch
      %15 = sbr.rel (0) target = $region5
    $region4: #{tpu_custom_call.1} parent=1 // pred_region
      %s17 = ssub.s32 128, 128
      %18 = vsyncadd [#allocation3], %s17
      %s20 = sshll.u32 [#allocation2], 4
      %s21 = int_to_ptr.vmem [resolvable:$true] %s20
      %23 = dma.hbm_to_vmem [thread:$0]  %s0, 128, %s21, [#allocation3]
    $region5: #{tpu_custom_call.1} parent=1 // pred_fallthru
      _
    // Predicated region
    $region6: #{tpu_custom_call.1} parent=1 // pred_check
      _
    $region7: #{tpu_custom_call.1} parent=1 // pred_check_branch
      %25 = sbr.rel (0) target = $region9
    $region8: #{tpu_custom_call.1} parent=1 // pred_region
      %s27 = ssub.s32 2048, 2048
      %28 = vsyncadd [#allocation6], %s27
      %s29 = sshll.u32 [#allocation5], 4
      %s30 = int_to_ptr.vmem [resolvable:$true] %s29
      %35 = dma.hbm_to_vmem [thread:$0]  %s1, 2048, %s30, [#allocation6], 128, 128, 8
    $region9: #{tpu_custom_call.1} parent=1 // pred_fallthru
      _
    // Predicated region
    $region10: #{tpu_custom_call.1} parent=1 // pred_check
      _
    $region11: #{tpu_custom_call.1} parent=1 // pred_check_branch
      %37 = sbr.rel (0) target = $region13
    $region12: #{tpu_custom_call.1} parent=1 // pred_region
      _
    $region13: #{tpu_custom_call.1} parent=1 // pred_fallthru
      _
    // Predicated region
    $region14: #{tpu_custom_call.1} parent=1 // pred_check
      _
    $region15: #{tpu_custom_call.1} parent=1 // pred_check_branch
      %39 = sbr.rel (0) target = $region17
    $region16: #{tpu_custom_call.1} parent=1 // pred_region
      %40 = dma.done [#allocation3], 128
    $region17: #{tpu_custom_call.1} parent=1 // pred_fallthru
      _
    // Predicated region
    $region18: #{tpu_custom_call.1} parent=1 // pred_check
      _
    $region19: #{tpu_custom_call.1} parent=1 // pred_check_branch
      %42 = sbr.rel (0) target = $region21
    $region20: #{tpu_custom_call.1} parent=1 // pred_region
      %43 = dma.done [#allocation6], 2048
    $region21: #{tpu_custom_call.1} parent=1 // pred_fallthru
      _
    %v44 = vld [vmem:[#allocation2] sm:$0xff]
    %v45 = vld [vmem:[#allocation5] sm:$0xff]
    %v46 = vld [vmem:[#allocation5 + $0x8] sm:$0xff]
    %v47 = vld [vmem:[#allocation5 + $0x10] sm:$0xff]
    %v48 = vld [vmem:[#allocation5 + $0x18] sm:$0xff]
    %v49 = vld [vmem:[#allocation5 + $0x20] sm:$0xff]
    %v50 = vld [vmem:[#allocation5 + $0x28] sm:$0xff]
    %v51 = vld [vmem:[#allocation5 + $0x30] sm:$0xff]
    %v52 = vld [vmem:[#allocation5 + $0x38] sm:$0xff]
    %v53 = vld [vmem:[#allocation5 + $0x40] sm:$0xff]
    %v54 = vld [vmem:[#allocation5 + $0x48] sm:$0xff]
    %v55 = vld [vmem:[#allocation5 + $0x50] sm:$0xff]
    %v56 = vld [vmem:[#allocation5 + $0x58] sm:$0xff]
    %v57 = vld [vmem:[#allocation5 + $0x60] sm:$0xff]
    %v58 = vld [vmem:[#allocation5 + $0x68] sm:$0xff]
    %v59 = vld [vmem:[#allocation5 + $0x70] sm:$0xff]
    %v60 = vld [vmem:[#allocation5 + $0x78] sm:$0xff]
    %v61 = vld [vmem:[%s2] sm:$0x1]
    %v63 = vlaneseq
    %v64 = vshrl.u32 %v63, 7
    %v65 = vsub.s32 0, %v64
    %v66 = vrot.slane %v61, %v65
    %68 = vmatprep.subr.mxu0 0.0
    %69 = vmatpush1.msra.mxu0 %v45
    %70 = vmatprep.subr.mxu0 0.0
    %71 = vmatpush1.msra.mxu0 %v46
    %72 = vmatprep.subr.mxu0 0.0
    %73 = vmatpush1.msra.mxu0 %v47
    %74 = vmatprep.subr.mxu0 0.0
    %75 = vmatpush1.msra.mxu0 %v48
    %76 = vmatprep.subr.mxu0 0.0
    %77 = vmatpush1.msra.mxu0 %v49
    %78 = vmatprep.subr.mxu0 0.0
    %79 = vmatpush1.msra.mxu0 %v50
    %80 = vmatprep.subr.mxu0 0.0
    %81 = vmatpush1.msra.mxu0 %v51
    %82 = vmatprep.subr.mxu0 0.0
    %83 = vmatpush1.msra.mxu0 %v52
    %84 = vmatprep.subr.mxu0 0.0
    %85 = vmatpush1.msra.mxu0 %v53
    %86 = vmatprep.subr.mxu0 0.0
    %87 = vmatpush1.msra.mxu0 %v54
    %88 = vmatprep.subr.mxu0 0.0
    %89 = vmatpush1.msra.mxu0 %v55
    %90 = vmatprep.subr.mxu0 0.0
    %91 = vmatpush1.msra.mxu0 %v56
    %92 = vmatprep.subr.mxu0 0.0
    %93 = vmatpush1.msra.mxu0 %v57
    %94 = vmatprep.subr.mxu0 0.0
    %95 = vmatpush1.msra.mxu0 %v58
    %96 = vmatprep.subr.mxu0 0.0
    %97 = vmatpush1.msra.mxu0 %v59
    %98 = vmatprep.subr.mxu0 0.0
    %99 = vmatpush1.msra.mxu0 %v60
    %100 = vmatprep.subr.mxu0 0.0
    %101 = vmatpush1.msra.mxu0 0.0
    %102 = vmatprep.subr.mxu0 0.0
    %103 = vmatpush1.msra.mxu0 0.0
    %104 = vmatprep.subr.mxu0 0.0
    %105 = vmatpush1.msra.mxu0 0.0
    %106 = vmatprep.subr.mxu0 0.0
    %107 = vmatpush1.msra.mxu0 0.0
    %108 = vmatprep.subr.mxu0 0.0
    %109 = vmatpush1.msra.mxu0 0.0
    %110 = vmatprep.subr.mxu0 0.0
    %111 = vmatpush1.msra.mxu0 0.0
    %112 = vmatprep.subr.mxu0 0.0
    %113 = vmatpush1.msra.mxu0 0.0
    %114 = vmatprep.subr.mxu0 0.0
    %115 = vmatpush1.msra.mxu0 0.0
    %116 = vmatprep.subr.mxu0 0.0
    %117 = vmatpush1.msra.mxu0 0.0
    %118 = vmatprep.subr.mxu0 0.0
    %119 = vmatpush1.msra.mxu0 0.0
    %120 = vmatprep.subr.mxu0 0.0
    %121 = vmatpush1.msra.mxu0 0.0
    %122 = vmatprep.subr.mxu0 0.0
    %123 = vmatpush1.msra.mxu0 0.0
    %124 = vmatprep.subr.mxu0 0.0
    %125 = vmatpush1.msra.mxu0 0.0
    %126 = vmatprep.subr.mxu0 0.0
    %127 = vmatpush1.msra.mxu0 0.0
    %128 = vmatprep.subr.mxu0 0.0
    %129 = vmatpush1.msra.mxu0 0.0
    %130 = vmatprep.subr.mxu0 0.0
    %131 = vmatpush1.msra.mxu0 0.0
    %132 = vmatprep.mubr.f32.mxu0 0.0
    %133 = vmatmul.mubr.f32.gmra.mrb[0].mxu0 %v44
    %v134 = vpop.f32.mrb[0].mxu0
    %v135 = vadd.f32 %v66, %v134
    %v136 = vpop.f32.mrb[0].mxu0
    %137 = vdwg.mxu0
    %138 = vst [vmem:[#allocation7] sm:$0xff] %v135
    %139 = vmax.xlane.f32.xlu0 %v135
    %v140 = vpop.xlane.xlu0 %139
    %v141 = vsub.f32 %v135, %v140
    %v142 = vmul.f32 %v141, 1.442695
    %v143 = vpow.pop %v142
    %144 = vadd.xlane.f32.xlu0 %v143
    %v145 = vpop.xlane.xlu0 %144
    %v146 = vrcp.pop %v145
    %v147 = vmul.f32 %v145, %v146
    %v148 = vsub.f32 2.0, %v147
    %v149 = vmul.f32 %v146, %v148
    %v150 = vmul.f32 %v143, %v149
    %151 = vst [vmem:[#allocation8] sm:$0xff] %v150
    // Predicated region
    $region22: #{tpu_custom_call.1} parent=1 // pred_check
      _
    $region23: #{tpu_custom_call.1} parent=1 // pred_check_branch
      %153 = sbr.rel (0) target = $region25
    $region24: #{tpu_custom_call.1} parent=1 // pred_region
      %s155 = ssub.s32 128, 128
      %156 = vsyncadd [#allocation4], %s155
      %s158 = sshll.u32 [#allocation7], 4
      %s159 = int_to_ptr.vmem [resolvable:$true] %s158
      %161 = dma.vmem_to_hbm [thread:$0]  %s159, 128, %s3, [#allocation4]
    $region25: #{tpu_custom_call.1} parent=1 // pred_fallthru
      _
    // Predicated region
    $region26: #{tpu_custom_call.1} parent=1 // pred_check
      _
    $region27: #{tpu_custom_call.1} parent=1 // pred_check_branch
      %163 = sbr.rel (0) target = $region29
    $region28: #{tpu_custom_call.1} parent=1 // pred_region
      %s165 = ssub.s32 128, 128
      %166 = vsyncadd [#allocation9], %s165
      %s168 = sshll.u32 [#allocation8], 4
      %s169 = int_to_ptr.vmem [resolvable:$true] %s168
      %171 = dma.vmem_to_hbm [thread:$0]  %s169, 128, %s4, [#allocation9]
    $region29: #{tpu_custom_call.1} parent=1 // pred_fallthru
      _
    // Predicated region
    $region30: #{tpu_custom_call.1} parent=1 // pred_check
      _
    $region31: #{tpu_custom_call.1} parent=1 // pred_check_branch
      %173 = sbr.rel (0) target = $region33
    $region32: #{tpu_custom_call.1} parent=1 // pred_region
      %174 = dma.done [#allocation4], 128
    $region33: #{tpu_custom_call.1} parent=1 // pred_fallthru
      _
    // Predicated region
    $region34: #{tpu_custom_call.1} parent=1 // pred_check
      _
    $region35: #{tpu_custom_call.1} parent=1 // pred_check_branch
      %176 = sbr.rel (0) target = $region37
    $region36: #{tpu_custom_call.1} parent=1 // pred_region
      %177 = dma.done [#allocation9], 128
    $region37: #{tpu_custom_call.1} parent=1 // pred_fallthru
      _
    %178 = vsyncpa [#allocation3], 1
    %179 = vsyncpa [#allocation6], 1
    %180 = vsyncpa [#allocation4], 1
    %181 = vsyncpa [#allocation9], 1

// kernel: tpu_custom_call.1
$region0: #{tpu_custom_call.1}
  #allocation0 [shape = 'u32[]', space=smem, size = 0x4, offset = 0x4, fixed_abs, tag = 'smem constant byte address 0x4 - core index']
  #allocation1 [shape = 'u32[144,128]{1,0:T(1,128)}', space=vmem, size = 0x12000, scoped, tag = 'internal scratch']
  %s0 = inlined_call_operand.hbm [shape: f32[8,128], index: 0, kind: input, shape index: {}]
  %s1 = inlined_call_operand.hbm [shape: f32[128,128], index: 1, kind: input, shape index: {}]
  %s2 = inlined_call_operand.vmem [shape: f32[1,128], index: 2, kind: input, shape index: {}]
  %s3 = inlined_call_operand.hbm [shape: f32[8,128], index: 3, kind: output, shape index: {0}]
  %s4 = inlined_call_operand.hbm [shape: f32[8,128], index: 4, kind: output, shape index: {1}]
  %5 = xla_tuple %s3, %s4
  %s6 = sld [smem:[#allocation0]]
  $region38: #{tpu_custom_call.1} parent=0
    _
  %s8 = ssub.s32 1, %s6
  %s9 = scalar_select 0, %s8, %s6
  $region1: #{tpu_custom_call.1} parent=0
    #allocation2 [shape = 'u8[4096]{0}', space=vmem, size = 0x1000, scoped, tag = 'input window, operand 0, single buffered']
    #allocation3 [shape = 's32[1]{0}', space=sflag, size = 0x4, scoped, tag = 'scoped memory for tpu_custom_call.1']
    #allocation4 [shape = 's32[1]{0}', space=sflag, size = 0x4, scoped, tag = 'scoped memory for tpu_custom_call.1']
    #allocation5 [shape = 'u8[65536]{0}', space=vmem, size = 0x10000, scoped, tag = 'input window, operand 1, single buffered']
    #allocation6 [shape = 's32[1]{0}', space=sflag, size = 0x4, scoped, tag = 'scoped memory for tpu_custom_call.1']
    #allocation7 [shape = 'u8[4096]{0}', space=vmem, size = 0x1000, scoped, tag = 'output window, operand 0, single buffered']
    #allocation8 [shape = 'u8[4096]{0}', space=vmem, size = 0x1000, scoped, tag = 'output window, operand 1, single buffered']
    #allocation9 [shape = 's32[1]{0}', space=sflag, size = 0x4, scoped, tag = 'scoped memory for tpu_custom_call.1']
    %10 = vsyncpa [#allocation3], 0
    %11 = vsyncpa [#allocation6], 0
    %12 = vsyncpa [#allocation4], 0
    %13 = vsyncpa [#allocation9], 0
    // Predicated region
    $region2: #{tpu_custom_call.1} parent=1 // pred_check
      _
    $region3: #{tpu_custom_call.1} parent=1 // pred_check_branch
      %15 = sbr.rel (0) target = $region5
    $region4: #{tpu_custom_call.1} parent=1 // pred_region
      %s17 = ssub.s32 128, 128
      %18 = vsyncadd [#allocation3], %s17
      %s20 = sshll.u32 [#allocation2], 4
      %s21 = int_to_ptr.vmem [resolvable:$true] %s20
      %23 = dma.hbm_to_vmem [thread:$0]  %s0, 128, %s21, [#allocation3]
    $region5: #{tpu_custom_call.1} parent=1 // pred_fallthru
      _
    // Predicated region
    $region6: #{tpu_custom_call.1} parent=1 // pred_check
      _
    $region7: #{tpu_custom_call.1} parent=1 // pred_check_branch
      %25 = sbr.rel (0) target = $region9
    $region8: #{tpu_custom_call.1} parent=1 // pred_region
      %s27 = ssub.s32 2048, 2048
      %28 = vsyncadd [#allocation6], %s27
      %s29 = sshll.u32 [#allocation5], 4
      %s30 = int_to_ptr.vmem [resolvable:$true] %s29
      %35 = dma.hbm_to_vmem [thread:$0]  %s1, 2048, %s30, [#allocation6], 128, 128, 8
    $region9: #{tpu_custom_call.1} parent=1 // pred_fallthru
      _
    // Predicated region
    $region10: #{tpu_custom_call.1} parent=1 // pred_check
      _
    $region11: #{tpu_custom_call.1} parent=1 // pred_check_branch
      %37 = sbr.rel (0) target = $region13
    $region12: #{tpu_custom_call.1} parent=1 // pred_region
      _
    $region13: #{tpu_custom_call.1} parent=1 // pred_fallthru
      _
    // Predicated region
    $region14: #{tpu_custom_call.1} parent=1 // pred_check
      _
    $region15: #{tpu_custom_call.1} parent=1 // pred_check_branch
      %39 = sbr.rel (0) target = $region17
    $region16: #{tpu_custom_call.1} parent=1 // pred_region
      %40 = dma.done [#allocation3], 128
    $region17: #{tpu_custom_call.1} parent=1 // pred_fallthru
      _
    // Predicated region
    $region18: #{tpu_custom_call.1} parent=1 // pred_check
      _
    $region19: #{tpu_custom_call.1} parent=1 // pred_check_branch
      %42 = sbr.rel (0) target = $region21
    $region20: #{tpu_custom_call.1} parent=1 // pred_region
      %43 = dma.done [#allocation6], 2048
    $region21: #{tpu_custom_call.1} parent=1 // pred_fallthru
      _
    %v44 = vld [vmem:[#allocation2] sm:$0xff]
    %v45 = vld [vmem:[#allocation5] sm:$0xff]
    %v46 = vld [vmem:[#allocation5 + $0x8] sm:$0xff]
    %v47 = vld [vmem:[#allocation5 + $0x10] sm:$0xff]
    %v48 = vld [vmem:[#allocation5 + $0x18] sm:$0xff]
    %v49 = vld [vmem:[#allocation5 + $0x20] sm:$0xff]
    %v50 = vld [vmem:[#allocation5 + $0x28] sm:$0xff]
    %v51 = vld [vmem:[#allocation5 + $0x30] sm:$0xff]
    %v52 = vld [vmem:[#allocation5 + $0x38] sm:$0xff]
    %v53 = vld [vmem:[#allocation5 + $0x40] sm:$0xff]
    %v54 = vld [vmem:[#allocation5 + $0x48] sm:$0xff]
    %v55 = vld [vmem:[#allocation5 + $0x50] sm:$0xff]
    %v56 = vld [vmem:[#allocation5 + $0x58] sm:$0xff]
    %v57 = vld [vmem:[#allocation5 + $0x60] sm:$0xff]
    %v58 = vld [vmem:[#allocation5 + $0x68] sm:$0xff]
    %v59 = vld [vmem:[#allocation5 + $0x70] sm:$0xff]
    %v60 = vld [vmem:[#allocation5 + $0x78] sm:$0xff]
    %v61 = vld [vmem:[%s2] sm:$0x1]
    %v63 = vlaneseq
    %v64 = vshrl.u32 %v63, 7
    %v65 = vsub.s32 0, %v64
    %v66 = vrot.slane %v61, %v65
    %68 = vmatprep.subr.mxu0 0.0
    %69 = vmatpush1.msra.mxu0 %v45
    %70 = vmatprep.subr.mxu0 0.0
    %71 = vmatpush1.msra.mxu0 %v46
    %72 = vmatprep.subr.mxu0 0.0
    %73 = vmatpush1.msra.mxu0 %v47
    %74 = vmatprep.subr.mxu0 0.0
    %75 = vmatpush1.msra.mxu0 %v48
    %76 = vmatprep.subr.mxu0 0.0
    %77 = vmatpush1.msra.mxu0 %v49
    %78 = vmatprep.subr.mxu0 0.0
    %79 = vmatpush1.msra.mxu0 %v50
    %80 = vmatprep.subr.mxu0 0.0
    %81 = vmatpush1.msra.mxu0 %v51
    %82 = vmatprep.subr.mxu0 0.0
    %83 = vmatpush1.msra.mxu0 %v52
    %84 = vmatprep.subr.mxu0 0.0
    %85 = vmatpush1.msra.mxu0 %v53
    %86 = vmatprep.subr.mxu0 0.0
    %87 = vmatpush1.msra.mxu0 %v54
    %88 = vmatprep.subr.mxu0 0.0
    %89 = vmatpush1.msra.mxu0 %v55
    %90 = vmatprep.subr.mxu0 0.0
    %91 = vmatpush1.msra.mxu0 %v56
    %92 = vmatprep.subr.mxu0 0.0
    %93 = vmatpush1.msra.mxu0 %v57
    %94 = vmatprep.subr.mxu0 0.0
    %95 = vmatpush1.msra.mxu0 %v58
    %96 = vmatprep.subr.mxu0 0.0
    %97 = vmatpush1.msra.mxu0 %v59
    %98 = vmatprep.subr.mxu0 0.0
    %99 = vmatpush1.msra.mxu0 %v60
    %100 = vmatprep.subr.mxu0 0.0
    %101 = vmatpush1.msra.mxu0 0.0
    %102 = vmatprep.subr.mxu0 0.0
    %103 = vmatpush1.msra.mxu0 0.0
    %104 = vmatprep.subr.mxu0 0.0
    %105 = vmatpush1.msra.mxu0 0.0
    %106 = vmatprep.subr.mxu0 0.0
    %107 = vmatpush1.msra.mxu0 0.0
    %108 = vmatprep.subr.mxu0 0.0
    %109 = vmatpush1.msra.mxu0 0.0
    %110 = vmatprep.subr.mxu0 0.0
    %111 = vmatpush1.msra.mxu0 0.0
    %112 = vmatprep.subr.mxu0 0.0
    %113 = vmatpush1.msra.mxu0 0.0
    %114 = vmatprep.subr.mxu0 0.0
    %115 = vmatpush1.msra.mxu0 0.0
    %116 = vmatprep.subr.mxu0 0.0
    %117 = vmatpush1.msra.mxu0 0.0
    %118 = vmatprep.subr.mxu0 0.0
    %119 = vmatpush1.msra.mxu0 0.0
    %120 = vmatprep.subr.mxu0 0.0
    %121 = vmatpush1.msra.mxu0 0.0
    %122 = vmatprep.subr.mxu0 0.0
    %123 = vmatpush1.msra.mxu0 0.0
    %124 = vmatprep.subr.mxu0 0.0
    %125 = vmatpush1.msra.mxu0 0.0
    %126 = vmatprep.subr.mxu0 0.0
    %127 = vmatpush1.msra.mxu0 0.0
    %128 = vmatprep.subr.mxu0 0.0
    %129 = vmatpush1.msra.mxu0 0.0
    %130 = vmatprep.subr.mxu0 0.0
    %131 = vmatpush1.msra.mxu0 0.0
    %132 = vmatprep.mubr.f32.mxu0 0.0
    %133 = vmatmul.mubr.f32.gmra.mrb[0].mxu0 %v44
    %v134 = vpop.f32.mrb[0].mxu0
    %v135 = vadd.f32 %v66, %v134
    %v136 = vpop.f32.mrb[0].mxu0
    %137 = vdwg.mxu0
    %138 = vst [vmem:[#allocation7] sm:$0xff] %v135
    %139 = vmax.xlane.f32.xlu0 %v135
    %v140 = vpop.xlane.xlu0 %139
    %v141 = vsub.f32 %v135, %v140
    %v142 = vmul.f32 %v141, 1.442695
    %v143 = vpow.pop %v142
    %144 = vadd.xlane.f32.xlu0 %v143
    %v145 = vpop.xlane.xlu0 %144
    %v146 = vrcp.pop %v145
    %v147 = vmul.f32 %v145, %v146
    %v148 = vsub.f32 2.0, %v147
    %v149 = vmul.f32 %v146, %v148
    %v150 = vmul.f32 %v143, %v149
    %151 = vst [vmem:[#allocation8] sm:$0xff] %v150
    // Predicated region
    $region22: #{tpu_custom_call.1} parent=1 // pred_check
      _
    $region23: #{tpu_custom_call.1} parent=1 // pred_check_branch
      %153 = sbr.rel (0) target = $region25
    $region24: #{tpu_custom_call.1} parent=1 // pred_region
      %s155 = ssub.s32 128, 128
      %156 = vsyncadd [#allocation4], %s155
      %s158 = sshll.u32 [#allocation7], 4
      %s159 = int_to_ptr.vmem [resolvable:$true] %s158
      %161 = dma.vmem_to_hbm [thread:$0]  %s159, 128, %s3, [#allocation4]
    $region25: #{tpu_custom_call.1} parent=1 // pred_fallthru
      _
    // Predicated region
    $region26: #{tpu_custom_call.1} parent=1 // pred_check
      _
    $region27: #{tpu_custom_call.1} parent=1 // pred_check_branch
      %163 = sbr.rel (0) target = $region29
    $region28: #{tpu_custom_call.1} parent=1 // pred_region
      %s165 = ssub.s32 128, 128
      %166 = vsyncadd [#allocation9], %s165
      %s168 = sshll.u32 [#allocation8], 4
      %s169 = int_to_ptr.vmem [resolvable:$true] %s168
      %171 = dma.vmem_to_hbm [thread:$0]  %s169, 128, %s4, [#allocation9]
    $region29: #{tpu_custom_call.1} parent=1 // pred_fallthru
      _
    // Predicated region
    $region30: #{tpu_custom_call.1} parent=1 // pred_check
      _
    $region31: #{tpu_custom_call.1} parent=1 // pred_check_branch
      %173 = sbr.rel (0) target = $region33
    $region32: #{tpu_custom_call.1} parent=1 // pred_region
      %174 = dma.done [#allocation4], 128
    $region33: #{tpu_custom_call.1} parent=1 // pred_fallthru
      _
    // Predicated region
    $region34: #{tpu_custom_call.1} parent=1 // pred_check
      _
    $region35: #{tpu_custom_call.1} parent=1 // pred_check_branch
      %176 = sbr.rel (0) target = $region37
    $region36: #{tpu_custom_call.1} parent=1 // pred_region
      %177 = dma.done [#allocation9], 128
    $region37: #{tpu_custom_call.1} parent=1 // pred_fallthru
      _
    %178 = vsyncpa [#allocation3], 1
    %179 = vsyncpa [#allocation6], 1
    %180 = vsyncpa [#allocation4], 1
    %181 = vsyncpa [#allocation9], 1

</llo_original>
